<compile_context>
chip_gen: v7x
topology: tpu7x:2x2x1
jax: 0.10.0
libtpu: 0.0.40
codegen_flags: <defaults>
</compile_context>

<pallas_src>
import jax
import jax.numpy as jnp
from jax import lax
from jax.experimental import pallas as pl
from jax.experimental.pallas import tpu as pltpu

EPS = 1e-5


def _cbn_kernel(x_ref, gamma_ref, beta_ref, out_ref):
    """x_ref/out_ref: (N, TC, HW), gamma_ref/beta_ref: (N, TC, 1)."""
    x = x_ref[...].astype(jnp.float32)
    n, _, hw = x.shape
    inv_count = 1.0 / float(n * hw)  # static -> folded at trace time, no runtime divide

    # One-pass per-channel batch statistics (biased variance), accumulated in f32.
    s = jnp.sum(x, axis=(0, 2), keepdims=True)            # (1, TC, 1)
    ss = jnp.sum(x * x, axis=(0, 2), keepdims=True)       # (1, TC, 1)
    mean = s * inv_count
    var = jnp.maximum(ss * inv_count - mean * mean, 0.0)  # clamp guards fp cancellation
    inv_std = lax.rsqrt(var + EPS)                        # EUP slot

    # Fused normalize + conditional affine: out = x * scale + bias.
    gamma = gamma_ref[...].astype(jnp.float32)            # (N, TC, 1)
    beta = beta_ref[...].astype(jnp.float32)              # (N, TC, 1)
    scale = gamma * inv_std                               # (N, TC, 1)
    bias = beta - mean * scale                            # (N, TC, 1)
    out_ref[...] = (x * scale + bias).astype(out_ref.dtype)


def _pick_c_tile(N, C, HW, itemsize, budget_bytes=4 * 1024 * 1024):
    """Largest channel tile (multiple of 8 dividing C, or C itself) fitting the VMEM budget."""
    if C <= 8:
        return C
    cands = [tc for tc in range(8, C, 8) if C % tc == 0] + [C]
    fitting = [tc for tc in cands if N * tc * HW * itemsize <= budget_bytes]
    return max(fitting) if fitting else min(cands)


def conditional_batch_norm_2d(x, y, embed_weight):
    """x: (N, C, H, W), y: (N,) int32, embed_weight: (num_classes, 2*C)."""
    N, C, H, W = x.shape
    HW = H * W

    # Glue: embedding lookup + chunk (tiny gather, done in plain JAX).
    emb = embed_weight[y]                                  # (N, 2C)
    gamma = emb[:, :C].reshape(N, C, 1)                    # channel in sublane, matches x
    beta = emb[:, C:].reshape(N, C, 1)

    x_r = x.reshape(N, C, HW)                              # NCHW -> (N, C, HW)

    itemsize = max(jnp.dtype(x.dtype).itemsize, 4)         # f32 intermediates in-kernel
    TC = _pick_c_tile(N, C, HW, itemsize)
    grid = (C // TC,)

    out = pl.pallas_call(
        _cbn_kernel,
        out_shape=jax.ShapeDtypeStruct((N, C, HW), x.dtype),
        grid=grid,
        in_specs=[
            pl.BlockSpec((N, TC, HW), lambda ci: (0, ci, 0)),
            pl.BlockSpec((N, TC, 1), lambda ci: (0, ci, 0)),
            pl.BlockSpec((N, TC, 1), lambda ci: (0, ci, 0)),
        ],
        out_specs=pl.BlockSpec((N, TC, HW), lambda ci: (0, ci, 0)),
        compiler_params=pltpu.CompilerParams(
            dimension_semantics=("parallel",),             # C-tiles are independent
            vmem_limit_bytes=32 * 1024 * 1024,             # safe on v5e/v6e/v7x
        ),
    )(x_r, gamma, beta)

    return out.reshape(N, C, H, W)


def _reference(x, y, embed_weight):
    N, C, H, W = x.shape
    mean = jnp.mean(x, axis=(0, 2, 3), keepdims=True)
    var = jnp.mean((x - mean) ** 2, axis=(0, 2, 3), keepdims=True)
    x_hat = (x - mean) / jnp.sqrt(var + EPS)
    emb = embed_weight[y]
    gamma = emb[:, :C].reshape(N, C, 1, 1)
    beta = emb[:, C:].reshape(N, C, 1, 1)
    return gamma * x_hat + beta


if __name__ == "__main__":
    num_features = 4
    num_classes = 10
    N, H, W = 2, 16, 16

    key = jax.random.PRNGKey(0)
    kx, ky, kg = jax.random.split(key, 3)

    # Deterministic parameter init matching the module's __init__:
    #   embed.weight[:, :num_features] ~ N(1, 0.02), embed.weight[:, num_features:] = 0
    gamma_init = 1.0 + 0.02 * jax.random.normal(kg, (num_classes, num_features), jnp.float32)
    beta_init = jnp.zeros((num_classes, num_features), jnp.float32)
    embed_weight = jnp.concatenate([gamma_init, beta_init], axis=1)  # (num_classes, 2*C)

    x = jax.random.normal(kx, (N, num_features, H, W), jnp.float32)
    y = jax.random.randint(ky, (N,), 0, num_classes, jnp.int32)

    out = conditional_batch_norm_2d(x, y, embed_weight)
    out = jax.block_until_ready(out)

    ref = _reference(x, y, embed_weight)
    assert out.shape == (N, num_features, H, W)
    assert jnp.allclose(out, ref, atol=1e-5, rtol=1e-5)

    print("KERNEL_OK")
</pallas_src>

<mosaic_0001>
module attributes {stable_mosaic.version = 11 : i64} {
  func.func @_cbn_kernel(%arg0: i32, %arg1: memref<2x4x256xf32, #tpu.memory_space<vmem>>, %arg2: memref<2x4x1xf32, #tpu.memory_space<vmem>>, %arg3: memref<2x4x1xf32, #tpu.memory_space<vmem>>, %arg4: memref<2x4x256xf32, #tpu.memory_space<vmem>>) attributes {dimension_semantics = [#tpu.dimension_semantics<parallel>], iteration_bounds = array<i64: 1>, scalar_prefetch = 0 : i64, scratch_operands = 0 : i64, tpu.core_type = #tpu.core_type<tc>, window_params = [{transform_indices = @transform_0, window_bounds = array<i64: 2, 4, 256>}, {transform_indices = @transform_1, window_bounds = array<i64: 2, 4, 1>}, {transform_indices = @transform_2, window_bounds = array<i64: 2, 4, 1>}, {transform_indices = @transform_3, window_bounds = array<i64: 2, 4, 256>}]} {
    %c0 = arith.constant 0 : index
    %c0_0 = arith.constant 0 : index
    %c0_1 = arith.constant 0 : index
    %0 = vector.load %arg1[%c0, %c0_0, %c0_1] : memref<2x4x256xf32, #tpu.memory_space<vmem>>, vector<2x4x256xf32>
    %cst = arith.constant dense<0.000000e+00> : vector<4xf32>
    %1 = vector.multi_reduction <add>, %0, %cst [0, 2] : vector<2x4x256xf32> to vector<4xf32>
    %2 = vector.shape_cast %1 : vector<4xf32> to vector<1x4x1xf32>
    %3 = arith.mulf %0, %0 : vector<2x4x256xf32>
    %cst_2 = arith.constant dense<0.000000e+00> : vector<4xf32>
    %4 = vector.multi_reduction <add>, %3, %cst_2 [0, 2] : vector<2x4x256xf32> to vector<4xf32>
    %5 = vector.shape_cast %4 : vector<4xf32> to vector<1x4x1xf32>
    %cst_3 = arith.constant 0.001953125 : f32
    %6 = vector.broadcast %cst_3 : f32 to vector<1x4x1xf32>
    %7 = arith.mulf %2, %6 : vector<1x4x1xf32>
    %cst_4 = arith.constant 0.001953125 : f32
    %8 = vector.broadcast %cst_4 : f32 to vector<1x4x1xf32>
    %9 = arith.mulf %5, %8 : vector<1x4x1xf32>
    %10 = arith.mulf %7, %7 : vector<1x4x1xf32>
    %11 = arith.subf %9, %10 : vector<1x4x1xf32>
    %cst_5 = arith.constant 0.000000e+00 : f32
    %12 = vector.broadcast %cst_5 : f32 to vector<1x4x1xf32>
    %13 = arith.maximumf %11, %12 : vector<1x4x1xf32>
    %cst_6 = arith.constant 9.99999974E-6 : f32
    %14 = vector.broadcast %cst_6 : f32 to vector<1x4x1xf32>
    %15 = arith.addf %13, %14 : vector<1x4x1xf32>
    %16 = math.rsqrt %15 : vector<1x4x1xf32>
    %c0_7 = arith.constant 0 : index
    %c0_8 = arith.constant 0 : index
    %c0_9 = arith.constant 0 : index
    %17 = vector.load %arg2[%c0_7, %c0_8, %c0_9] : memref<2x4x1xf32, #tpu.memory_space<vmem>>, vector<2x4x1xf32>
    %c0_10 = arith.constant 0 : index
    %c0_11 = arith.constant 0 : index
    %c0_12 = arith.constant 0 : index
    %18 = vector.load %arg3[%c0_10, %c0_11, %c0_12] : memref<2x4x1xf32, #tpu.memory_space<vmem>>, vector<2x4x1xf32>
    %19 = vector.broadcast %16 : vector<1x4x1xf32> to vector<2x4x1xf32>
    %20 = arith.mulf %17, %19 : vector<2x4x1xf32>
    %21 = vector.broadcast %7 : vector<1x4x1xf32> to vector<2x4x1xf32>
    %22 = arith.mulf %21, %20 : vector<2x4x1xf32>
    %23 = arith.subf %18, %22 : vector<2x4x1xf32>
    %24 = vector.broadcast %20 : vector<2x4x1xf32> to vector<2x4x256xf32>
    %25 = arith.mulf %0, %24 : vector<2x4x256xf32>
    %26 = vector.broadcast %23 : vector<2x4x1xf32> to vector<2x4x256xf32>
    %27 = arith.addf %25, %26 : vector<2x4x256xf32>
    %c0_13 = arith.constant 0 : index
    %c0_14 = arith.constant 0 : index
    %c0_15 = arith.constant 0 : index
    %28 = vector.load %arg4[%c0_13, %c0_14, %c0_15] : memref<2x4x256xf32, #tpu.memory_space<vmem>>, vector<2x4x256xf32>
    tpu.vector_store %arg4[%c0_13, %c0_14, %c0_15], %27 {strides = array<i32>} : memref<2x4x256xf32, #tpu.memory_space<vmem>>, vector<2x4x256xf32>,
    return
  }
  func.func @transform_0(%arg0: i32) -> (i32, i32, i32) {
    %c0_i32 = arith.constant 0 : i32
    %c0_i32_0 = arith.constant 0 : i32
    %c0_i32_1 = arith.constant 0 : i32
    return %c0_i32, %arg0, %c0_i32_0 : i32, i32, i32
  }
  func.func @transform_1(%arg0: i32) -> (i32, i32, i32) {
    %c0_i32 = arith.constant 0 : i32
    %c0_i32_0 = arith.constant 0 : i32
    %c0_i32_1 = arith.constant 0 : i32
    return %c0_i32, %arg0, %c0_i32_0 : i32, i32, i32
  }
  func.func @transform_2(%arg0: i32) -> (i32, i32, i32) {
    %c0_i32 = arith.constant 0 : i32
    %c0_i32_0 = arith.constant 0 : i32
    %c0_i32_1 = arith.constant 0 : i32
    return %c0_i32, %arg0, %c0_i32_0 : i32, i32, i32
  }
  func.func @transform_3(%arg0: i32) -> (i32, i32, i32) {
    %c0_i32 = arith.constant 0 : i32
    %c0_i32_0 = arith.constant 0 : i32
    %c0_i32_1 = arith.constant 0 : i32
    return %c0_i32, %arg0, %c0_i32_0 : i32, i32, i32
  }
}

</mosaic_0001>

<llo_original>
// kernel: tpu_custom_call.1
$region0: #{tpu_custom_call.1}
  #allocation0 [shape = 'u32[]', space=smem, size = 0x4, offset = 0x4, fixed_abs, tag = 'smem constant byte address 0x4 - core index']
  #allocation1 [shape = 'u32[144,128]{1,0:T(1,128)}', space=vmem, size = 0x12000, scoped, tag = 'internal scratch']
  %s0 = inlined_call_operand.vmem [shape: f32[2,4,256], index: 0, kind: input, shape index: {}]
  %s1 = inlined_call_operand.vmem [shape: f32[2,4,1], index: 1, kind: input, shape index: {}]
  %s2 = inlined_call_operand.vmem [shape: f32[2,4,1], index: 2, kind: input, shape index: {}]
  %s3 = inlined_call_operand.hbm [shape: f32[2,4,256], index: 3, kind: output, shape index: {}]
  %s4 = sld [smem:[#allocation0]]
  $region22: #{tpu_custom_call.1} parent=0
    _
  %s6 = ssub.s32 1, %s4
  %s7 = scalar_select 0, %s6, %s4
  $region1: #{tpu_custom_call.1} parent=0
    #allocation2 [shape = 'u8[8192]{0}', space=vmem, size = 0x2000, scoped, tag = 'output window, operand 0, single buffered']
    #allocation3 [shape = 's32[1]{0}', space=sflag, size = 0x4, scoped, tag = 'scoped memory for tpu_custom_call.1']
    %8 = vsyncpa [#allocation3], 0
    // Predicated region
    $region2: #{tpu_custom_call.1} parent=1 // pred_check
      _
    $region3: #{tpu_custom_call.1} parent=1 // pred_check_branch
      %10 = sbr.rel (0) target = $region5
    $region4: #{tpu_custom_call.1} parent=1 // pred_region
      _
    $region5: #{tpu_custom_call.1} parent=1 // pred_fallthru
      _
    // Predicated region
    $region6: #{tpu_custom_call.1} parent=1 // pred_check
      _
    $region7: #{tpu_custom_call.1} parent=1 // pred_check_branch
      %12 = sbr.rel (0) target = $region9
    $region8: #{tpu_custom_call.1} parent=1 // pred_region
      _
    $region9: #{tpu_custom_call.1} parent=1 // pred_fallthru
      _
    // Predicated region
    $region10: #{tpu_custom_call.1} parent=1 // pred_check
      _
    $region11: #{tpu_custom_call.1} parent=1 // pred_check_branch
      %14 = sbr.rel (0) target = $region13
    $region12: #{tpu_custom_call.1} parent=1 // pred_region
      _
    $region13: #{tpu_custom_call.1} parent=1 // pred_fallthru
      _
    %v15 = vld [vmem:[%s0] sm:$0xff]
    %v16 = vld [vmem:[%s0 + $0x8] sm:$0xff]
    %v19 = vcombine.high %v15, %v15
    %v20 = vcombine.high %v16, %v16
    %vm23 = vcmask 1043456
    %v24 = vsel %vm23, %v15, 0.0
    %v25 = vsel %vm23, %v19, 0.0
    %v26 = vadd.f32 %v24, %v25
    %v27 = vsel %vm23, %v16, 0.0
    %v28 = vadd.f32 %v26, %v27
    %v29 = vsel %vm23, %v20, 0.0
    %v30 = vadd.f32 %v28, %v29
    %31 = vadd.xlane.f32.xlu0 %v30
    %v32 = vpop.xlane.xlu0 %31
    %v33 = vmul.f32 %v15, %v15
    %v34 = vmul.f32 %v16, %v16
    %v37 = vcombine.high %v33, %v33
    %v38 = vcombine.high %v34, %v34
    %v41 = vsel %vm23, %v33, 0.0
    %v42 = vsel %vm23, %v37, 0.0
    %v43 = vadd.f32 %v41, %v42
    %v44 = vsel %vm23, %v34, 0.0
    %v45 = vadd.f32 %v43, %v44
    %v46 = vsel %vm23, %v38, 0.0
    %v47 = vadd.f32 %v45, %v46
    %48 = vadd.xlane.f32.xlu0 %v47
    %v49 = vpop.xlane.xlu0 %48
    %v50 = vmul.f32 %v32, 0.001953125
    %v51 = vmul.f32 %v49, 0.001953125
    %v52 = vmul.f32 %v50, %v50
    %v53 = vsub.f32 %v51, %v52
    %v54 = vmax.f32 %v53, 0.0
    %v55 = vadd.f32 %v54, 1e-05
    %v56 = vrsqrt.pop %v55
    %v57 = vld [vmem:[%s1] sm:$0xf]
    %v58 = vld [vmem:[%s1 + $0x4] sm:$0xf]
    %v59 = vld [vmem:[%s2] sm:$0xf]
    %v60 = vld [vmem:[%s2 + $0x4] sm:$0xf]
    %v61 = vmul.f32 %v57, %v56
    %v62 = vmul.f32 %v58, %v56
    %v63 = vmul.f32 %v50, %v61
    %v64 = vmul.f32 %v50, %v62
    %v65 = vsub.f32 %v59, %v63
    %v66 = vsub.f32 %v60, %v64
    %68 = vset.pattern.permute.xlu0 0
    %69 = vperm.xlu0 %68, %v61
    %v70 = vpop.permute.xlu0 %69
    %72 = vset.pattern.permute.xlu0 0
    %73 = vperm.xlu0 %72, %v62
    %v74 = vpop.permute.xlu0 %73
    %v76 = vunpack.c.l.s4 839922192
    %v77 = vunpack.c.0.s8 %v76
    %v78 = vlaneseq
    %v79 = vshrl.u32 %v78, 7
    %v80 = vsub.s32 %v77, %v79
    %v81 = vrot.slane %v70, %v80
    %v83 = vunpack.c.l.s4 839922192
    %v84 = vunpack.c.0.s8 %v83
    %v85 = vlaneseq
    %v86 = vshrl.u32 %v85, 7
    %v87 = vsub.s32 %v84, %v86
    %v88 = vrot.slane %v74, %v87
    %v91 = vmul.f32 %v15, %v81
    %v92 = vmul.f32 %v16, %v88
    %94 = vset.pattern.permute.xlu0 0
    %95 = vperm.xlu0 %94, %v65
    %v96 = vpop.permute.xlu0 %95
    %98 = vset.pattern.permute.xlu0 0
    %99 = vperm.xlu0 %98, %v66
    %v100 = vpop.permute.xlu0 %99
    %v102 = vunpack.c.l.s4 839922192
    %v103 = vunpack.c.0.s8 %v102
    %v104 = vlaneseq
    %v105 = vshrl.u32 %v104, 7
    %v106 = vsub.s32 %v103, %v105
    %v107 = vrot.slane %v96, %v106
    %v109 = vunpack.c.l.s4 839922192
    %v110 = vunpack.c.0.s8 %v109
    %v111 = vlaneseq
    %v112 = vshrl.u32 %v111, 7
    %v113 = vsub.s32 %v110, %v112
    %v114 = vrot.slane %v100, %v113
    %v117 = vadd.f32 %v91, %v107
    %v118 = vadd.f32 %v92, %v114
    %119 = vst [vmem:[#allocation2] sm:$0xff] %v117
    %120 = vst [vmem:[#allocation2 + $0x8] sm:$0xff] %v118
    // Predicated region
    $region14: #{tpu_custom_call.1} parent=1 // pred_check
      _
    $region15: #{tpu_custom_call.1} parent=1 // pred_check_branch
      %122 = sbr.rel (0) target = $region17
    $region16: #{tpu_custom_call.1} parent=1 // pred_region
      %s124 = ssub.s32 256, 256
      %125 = vsyncadd [#allocation3], %s124
      %s126 = sshll.u32 [#allocation2], 4
      %s127 = int_to_ptr.vmem [resolvable:$true] %s126
      %132 = dma.vmem_to_hbm [thread:$0]  %s127, 256, %s3, [#allocation3], 128, 128, 8
    $region17: #{tpu_custom_call.1} parent=1 // pred_fallthru
      _
    // Predicated region
    $region18: #{tpu_custom_call.1} parent=1 // pred_check
      _
    $region19: #{tpu_custom_call.1} parent=1 // pred_check_branch
      %134 = sbr.rel (0) target = $region21
    $region20: #{tpu_custom_call.1} parent=1 // pred_region
      %135 = dma.done [#allocation3], 256
    $region21: #{tpu_custom_call.1} parent=1 // pred_fallthru
      _
    %136 = vsyncpa [#allocation3], 1

</llo_original>
